<compile_context>
chip_gen: v7x
topology: tpu7x:2x2x1
jax: 0.10.0
libtpu: 0.0.40
codegen_flags: <defaults>
</compile_context>

<pallas_src>
import functools

import jax
import jax.numpy as jnp
from jax.experimental import pallas as pl
from jax.experimental.pallas import tpu as pltpu


def _mlp_kernel(x_ref, w1_ref, b1_ref, w2_ref, b2_ref, w3_ref, b3_ref, o_ref):
    """One row-tile of the 3-layer MLP: Linear->ReLU->Linear->ReLU->Linear.

    Layer 1 (K=3) on the VPU (broadcast FMAs); layers 2/3 on the MXU with
    bf16 operands and f32 accumulation (bias add / ReLU in f32).
    """
    x = x_ref[...].astype(jnp.float32)                         # (tm, 3)
    w1 = w1_ref[...]                                           # (3, 128) f32

    # ---- layer 1 on the VPU: three broadcast FMAs ------------------------
    h1 = (x[:, 0:1] * w1[0:1, :]
          + x[:, 1:2] * w1[1:2, :]
          + x[:, 2:3] * w1[2:3, :]
          + b1_ref[...])                                       # (tm, 128) f32
    h1 = jnp.maximum(h1, 0.0)

    # ---- layer 2 on the MXU (bf16 operands, f32 accumulate) --------------
    h2 = jnp.dot(h1.astype(w2_ref.dtype), w2_ref[...],
                 preferred_element_type=jnp.float32) + b2_ref[...]
    h2 = jnp.maximum(h2, 0.0)                                  # (tm, 512) f32

    # ---- layer 3 on the MXU ----------------------------------------------
    out = jnp.dot(h2.astype(w3_ref.dtype), w3_ref[...],
                  preferred_element_type=jnp.float32) + b3_ref[...]
    o_ref[...] = out.astype(o_ref.dtype)                       # (tm, E)


def _default_tile_m(M: int) -> int:
    """Pick a row-tile: 256-aligned to fill the 2x256 MXU (v6e/v7x), capped at
    1024 to stay far under v7x's scoped-VMEM limit, and >=2 grid steps so the
    'parallel' axis can shard across both v7x TensorCores."""
    if M >= 4096:
        return 1024
    if M >= 512:
        half = (M + 1) // 2
        return max(256, (half // 256) * 256)
    # Tiny inputs: split into two 8-aligned tiles so both cores do work.
    half = (M + 1) // 2
    return max(8, ((half + 7) // 8) * 8)


@functools.partial(jax.jit, static_argnames=("tile_m", "use_bf16_matmul"))
def point_cloud_projector(points, params, *, tile_m=None, use_bf16_matmul=True):
    """points: (B, N_pts, 3) float32 -> tokens (B, N_pts, output_dim)."""
    w1, b1, w2, b2, w3, b3 = params
    B, N, C = points.shape
    assert C == 3
    in_dim, h1_dim = w1.shape
    h2_dim = w2.shape[1]
    out_dim = w3.shape[1]
    # Kernel's VPU layer-1 assumes the 3-tap (pos_enc=False) input.
    assert in_dim == 3, "only pos_enc=False (in_dim=3) is supported"

    M = B * N
    if tile_m is None:
        tile_m = _default_tile_m(M)

    x = points.reshape(M, C)

    # Pad rows up to a multiple of the tile so the grid is exact. Padded rows
    # produce garbage outputs which are sliced off below.
    M_pad = ((M + tile_m - 1) // tile_m) * tile_m
    if M_pad != M:
        x = jnp.pad(x, ((0, M_pad - M), (0, 0)))

    # Layer-1 weight stays f32 (consumed by the VPU); layers 2/3 are pre-cast
    # to bf16 once here so the MXU runs at its bf16-native rate per grid step.
    mm_dtype = jnp.bfloat16 if use_bf16_matmul else w2.dtype
    w1f = w1.astype(jnp.float32)
    w2c = w2.astype(mm_dtype)
    w3c = w3.astype(mm_dtype)

    # Biases as (1, D) rows so they broadcast inside the kernel (kept f32).
    b1r = b1.reshape(1, h1_dim).astype(jnp.float32)
    b2r = b2.reshape(1, h2_dim).astype(jnp.float32)
    b3r = b3.reshape(1, out_dim).astype(jnp.float32)

    grid = (M_pad // tile_m,)

    out = pl.pallas_call(
        _mlp_kernel,
        out_shape=jax.ShapeDtypeStruct((M_pad, out_dim), points.dtype),
        grid_spec=pltpu.PrefetchScalarGridSpec(
            num_scalar_prefetch=0,
            grid=grid,
            in_specs=[
                pl.BlockSpec((tile_m, in_dim), lambda i: (i, 0)),   # x tile
                pl.BlockSpec((in_dim, h1_dim), lambda i: (0, 0)),   # W1 (f32, VPU)
                pl.BlockSpec((1, h1_dim), lambda i: (0, 0)),        # b1
                pl.BlockSpec((h1_dim, h2_dim), lambda i: (0, 0)),   # W2 (bf16)
                pl.BlockSpec((1, h2_dim), lambda i: (0, 0)),        # b2
                pl.BlockSpec((h2_dim, out_dim), lambda i: (0, 0)),  # W3 (bf16)
                pl.BlockSpec((1, out_dim), lambda i: (0, 0)),       # b3
            ],
            out_specs=pl.BlockSpec((tile_m, out_dim), lambda i: (i, 0)),
        ),
        compiler_params=pltpu.CompilerParams(
            dimension_semantics=("parallel",),
            # Explicit budget: safe on v7x (64 MiB phys) and identical to the
            # v5e/v6e default; tile_m<=1024 uses only a few MiB of this.
            vmem_limit_bytes=32 * 1024 * 1024,
        ),
    )(x, w1f, b1r, w2c, b2r, w3c, b3r)

    return out[:M].reshape(B, N, out_dim)


def init_params(key, output_dim, pos_enc=False, dtype=jnp.float32):
    """Deterministic init matching nn.Linear shapes (weights stored transposed
    as (in_dim, out_dim) for row-major matmul)."""
    in_dim = 3 * (1 + 4) if pos_enc else 3
    dims = [(in_dim, 128), (128, 512), (512, output_dim)]
    keys = jax.random.split(key, 2 * len(dims))
    params = []
    for li, (din, dout) in enumerate(dims):
        bound = 1.0 / jnp.sqrt(jnp.asarray(din, dtype=jnp.float32))
        w = jax.random.uniform(keys[2 * li], (din, dout), dtype=dtype,
                               minval=-bound, maxval=bound)
        b = jax.random.uniform(keys[2 * li + 1], (dout,), dtype=dtype,
                               minval=-bound, maxval=bound)
        params += [w, b]
    return tuple(params)


def reference_forward_f32(points, params):
    """Pure-JAX f32 reference (module semantics)."""
    w1, b1, w2, b2, w3, b3 = params
    h1 = jnp.maximum(points @ w1 + b1, 0.0)
    h2 = jnp.maximum(h1 @ w2 + b2, 0.0)
    return h2 @ w3 + b3


def reference_forward_bf16(points, params):
    """Pure-JAX reference that mirrors the kernel's bf16-matmul numerics."""
    w1, b1, w2, b2, w3, b3 = params
    h1 = jnp.maximum(points @ w1 + b1, 0.0)
    h2 = jnp.dot(h1.astype(jnp.bfloat16), w2.astype(jnp.bfloat16),
                 preferred_element_type=jnp.float32) + b2
    h2 = jnp.maximum(h2, 0.0)
    return jnp.dot(h2.astype(jnp.bfloat16), w3.astype(jnp.bfloat16),
                   preferred_element_type=jnp.float32) + b3


if __name__ == "__main__":
    key = jax.random.PRNGKey(0)
    k_pts, k_par = jax.random.split(key)

    B, N_pts, output_dim = 2, 64, 256
    points = jax.random.uniform(k_pts, (B, N_pts, 3), dtype=jnp.float32,
                                minval=-1.0, maxval=1.0)
    params = init_params(k_par, output_dim, pos_enc=False)

    tok = point_cloud_projector(points, params)          # auto tile_m (2 grid steps)
    tok = jax.block_until_ready(tok)
    assert tok.shape == (B, N_pts, output_dim), tok.shape

    # Tight check against a reference with matching bf16-matmul numerics.
    ref_bf16 = reference_forward_bf16(points, params)
    assert jnp.allclose(tok, ref_bf16, atol=1e-3, rtol=1e-3), \
        "mismatch vs bf16-matched reference"

    # Loose check against the exact f32 module semantics (bf16 matmul drift).
    ref_f32 = reference_forward_f32(points, params)
    assert jnp.allclose(tok, ref_f32, atol=5e-2, rtol=5e-2), \
        "mismatch vs f32 reference"

    print("KERNEL_OK")
</pallas_src>

<mosaic_0001>
module attributes {stable_mosaic.version = 11 : i64} {
  func.func @_mlp_kernel(%arg0: i32, %arg1: memref<64x3xf32, #tpu.memory_space<vmem>>, %arg2: memref<3x128xf32, #tpu.memory_space<vmem>>, %arg3: memref<1x128xf32, #tpu.memory_space<vmem>>, %arg4: memref<128x512xbf16, #tpu.memory_space<vmem>>, %arg5: memref<1x512xf32, #tpu.memory_space<vmem>>, %arg6: memref<512x256xbf16, #tpu.memory_space<vmem>>, %arg7: memref<1x256xf32, #tpu.memory_space<vmem>>, %arg8: memref<64x256xf32, #tpu.memory_space<vmem>>) attributes {dimension_semantics = [#tpu.dimension_semantics<parallel>], iteration_bounds = array<i64: 2>, scalar_prefetch = 0 : i64, scratch_operands = 0 : i64, tpu.core_type = #tpu.core_type<tc>, window_params = [{transform_indices = @transform_0, window_bounds = array<i64: 64, 3>}, {pipeline_mode = #tpu.pipeline_mode<synchronous>, transform_indices = @transform_1, window_bounds = array<i64: 3, 128>}, {pipeline_mode = #tpu.pipeline_mode<synchronous>, transform_indices = @transform_2, window_bounds = array<i64: 1, 128>}, {pipeline_mode = #tpu.pipeline_mode<synchronous>, transform_indices = @transform_3, window_bounds = array<i64: 128, 512>}, {pipeline_mode = #tpu.pipeline_mode<synchronous>, transform_indices = @transform_4, window_bounds = array<i64: 1, 512>}, {pipeline_mode = #tpu.pipeline_mode<synchronous>, transform_indices = @transform_5, window_bounds = array<i64: 512, 256>}, {pipeline_mode = #tpu.pipeline_mode<synchronous>, transform_indices = @transform_6, window_bounds = array<i64: 1, 256>}, {transform_indices = @transform_7, window_bounds = array<i64: 64, 256>}]} {
    %c0 = arith.constant 0 : index
    %c0_0 = arith.constant 0 : index
    %0 = vector.load %arg1[%c0, %c0_0] : memref<64x3xf32, #tpu.memory_space<vmem>>, vector<64x3xf32>
    %c0_1 = arith.constant 0 : index
    %c0_2 = arith.constant 0 : index
    %1 = vector.load %arg2[%c0_1, %c0_2] : memref<3x128xf32, #tpu.memory_space<vmem>>, vector<3x128xf32>
    %2 = vector.extract_strided_slice %0 {offsets = [0, 0], sizes = [64, 1], strides = [1, 1]} : vector<64x3xf32> to vector<64x1xf32>
    %3 = vector.extract_strided_slice %1 {offsets = [0, 0], sizes = [1, 128], strides = [1, 1]} : vector<3x128xf32> to vector<1x128xf32>
    %4 = vector.broadcast %2 : vector<64x1xf32> to vector<64x128xf32>
    %5 = vector.broadcast %3 : vector<1x128xf32> to vector<64x128xf32>
    %6 = arith.mulf %4, %5 : vector<64x128xf32>
    %7 = vector.extract_strided_slice %0 {offsets = [0, 1], sizes = [64, 1], strides = [1, 1]} : vector<64x3xf32> to vector<64x1xf32>
    %8 = vector.extract_strided_slice %1 {offsets = [1, 0], sizes = [1, 128], strides = [1, 1]} : vector<3x128xf32> to vector<1x128xf32>
    %9 = vector.broadcast %7 : vector<64x1xf32> to vector<64x128xf32>
    %10 = vector.broadcast %8 : vector<1x128xf32> to vector<64x128xf32>
    %11 = arith.mulf %9, %10 : vector<64x128xf32>
    %12 = arith.addf %6, %11 : vector<64x128xf32>
    %13 = vector.extract_strided_slice %0 {offsets = [0, 2], sizes = [64, 1], strides = [1, 1]} : vector<64x3xf32> to vector<64x1xf32>
    %14 = vector.extract_strided_slice %1 {offsets = [2, 0], sizes = [1, 128], strides = [1, 1]} : vector<3x128xf32> to vector<1x128xf32>
    %15 = vector.broadcast %13 : vector<64x1xf32> to vector<64x128xf32>
    %16 = vector.broadcast %14 : vector<1x128xf32> to vector<64x128xf32>
    %17 = arith.mulf %15, %16 : vector<64x128xf32>
    %18 = arith.addf %12, %17 : vector<64x128xf32>
    %c0_3 = arith.constant 0 : index
    %c0_4 = arith.constant 0 : index
    %19 = vector.load %arg3[%c0_3, %c0_4] : memref<1x128xf32, #tpu.memory_space<vmem>>, vector<1x128xf32>
    %20 = vector.broadcast %19 : vector<1x128xf32> to vector<64x128xf32>
    %21 = arith.addf %18, %20 : vector<64x128xf32>
    %cst = arith.constant 0.000000e+00 : f32
    %22 = vector.broadcast %cst : f32 to vector<64x128xf32>
    %23 = arith.maximumf %21, %22 : vector<64x128xf32>
    %24 = arith.truncf %23 : vector<64x128xf32> to vector<64x128xbf16>
    %c0_5 = arith.constant 0 : index
    %c0_6 = arith.constant 0 : index
    %25 = vector.load %arg4[%c0_5, %c0_6] : memref<128x512xbf16, #tpu.memory_space<vmem>>, vector<128x512xbf16>
    %cst_7 = arith.constant dense<0.000000e+00> : vector<64x512xf32>
    %26 = tpu.matmul %24, %25, %cst_7 {dimension_numbers = #tpu.dot_dimension_numbers<[1], [0], [0], [1], [0, 0, 1, 1], [], []>} : vector<64x128xbf16>, vector<128x512xbf16>, vector<64x512xf32> -> vector<64x512xf32>
    %c0_8 = arith.constant 0 : index
    %c0_9 = arith.constant 0 : index
    %27 = vector.load %arg5[%c0_8, %c0_9] : memref<1x512xf32, #tpu.memory_space<vmem>>, vector<1x512xf32>
    %28 = vector.broadcast %27 : vector<1x512xf32> to vector<64x512xf32>
    %29 = arith.addf %26, %28 : vector<64x512xf32>
    %cst_10 = arith.constant 0.000000e+00 : f32
    %30 = vector.broadcast %cst_10 : f32 to vector<64x512xf32>
    %31 = arith.maximumf %29, %30 : vector<64x512xf32>
    %32 = arith.truncf %31 : vector<64x512xf32> to vector<64x512xbf16>
    %c0_11 = arith.constant 0 : index
    %c0_12 = arith.constant 0 : index
    %33 = vector.load %arg6[%c0_11, %c0_12] : memref<512x256xbf16, #tpu.memory_space<vmem>>, vector<512x256xbf16>
    %cst_13 = arith.constant dense<0.000000e+00> : vector<64x256xf32>
    %34 = tpu.matmul %32, %33, %cst_13 {dimension_numbers = #tpu.dot_dimension_numbers<[1], [0], [0], [1], [0, 0, 1, 1], [], []>} : vector<64x512xbf16>, vector<512x256xbf16>, vector<64x256xf32> -> vector<64x256xf32>
    %c0_14 = arith.constant 0 : index
    %c0_15 = arith.constant 0 : index
    %35 = vector.load %arg7[%c0_14, %c0_15] : memref<1x256xf32, #tpu.memory_space<vmem>>, vector<1x256xf32>
    %36 = vector.broadcast %35 : vector<1x256xf32> to vector<64x256xf32>
    %37 = arith.addf %34, %36 : vector<64x256xf32>
    %c0_16 = arith.constant 0 : index
    %c0_17 = arith.constant 0 : index
    %38 = vector.load %arg8[%c0_16, %c0_17] : memref<64x256xf32, #tpu.memory_space<vmem>>, vector<64x256xf32>
    tpu.vector_store %arg8[%c0_16, %c0_17], %37 {strides = array<i32>} : memref<64x256xf32, #tpu.memory_space<vmem>>, vector<64x256xf32>,
    return
  }
  func.func @transform_0(%arg0: i32) -> (i32, i32) {
    %c0_i32 = arith.constant 0 : i32
    %c0_i32_0 = arith.constant 0 : i32
    return %arg0, %c0_i32 : i32, i32
  }
  func.func @transform_1(%arg0: i32) -> (i32, i32) {
    %c0_i32 = arith.constant 0 : i32
    %c0_i32_0 = arith.constant 0 : i32
    %c0_i32_1 = arith.constant 0 : i32
    return %c0_i32, %c0_i32_0 : i32, i32
  }
  func.func @transform_2(%arg0: i32) -> (i32, i32) {
    %c0_i32 = arith.constant 0 : i32
    %c0_i32_0 = arith.constant 0 : i32
    %c0_i32_1 = arith.constant 0 : i32
    return %c0_i32, %c0_i32_0 : i32, i32
  }
  func.func @transform_3(%arg0: i32) -> (i32, i32) {
    %c0_i32 = arith.constant 0 : i32
    %c0_i32_0 = arith.constant 0 : i32
    %c0_i32_1 = arith.constant 0 : i32
    return %c0_i32, %c0_i32_0 : i32, i32
  }
  func.func @transform_4(%arg0: i32) -> (i32, i32) {
    %c0_i32 = arith.constant 0 : i32
    %c0_i32_0 = arith.constant 0 : i32
    %c0_i32_1 = arith.constant 0 : i32
    return %c0_i32, %c0_i32_0 : i32, i32
  }
  func.func @transform_5(%arg0: i32) -> (i32, i32) {
    %c0_i32 = arith.constant 0 : i32
    %c0_i32_0 = arith.constant 0 : i32
    %c0_i32_1 = arith.constant 0 : i32
    return %c0_i32, %c0_i32_0 : i32, i32
  }
  func.func @transform_6(%arg0: i32) -> (i32, i32) {
    %c0_i32 = arith.constant 0 : i32
    %c0_i32_0 = arith.constant 0 : i32
    %c0_i32_1 = arith.constant 0 : i32
    return %c0_i32, %c0_i32_0 : i32, i32
  }
  func.func @transform_7(%arg0: i32) -> (i32, i32) {
    %c0_i32 = arith.constant 0 : i32
    %c0_i32_0 = arith.constant 0 : i32
    return %arg0, %c0_i32 : i32, i32
  }
}

</mosaic_0001>

<llo_original>
// kernel: point_cloud_projector.1
$region0: #{point_cloud_projector.1}
  #allocation0 [shape = 'u32[]', space=smem, size = 0x4, offset = 0x4, fixed_abs, tag = 'smem constant byte address 0x4 - core index']
  #allocation1 [shape = 'u32[144,128]{1,0:T(1,128)}', space=vmem, size = 0x12000, scoped, tag = 'internal scratch']
  %s0 = inlined_call_operand.vmem [shape: f32[128,3], index: 0, kind: input, shape index: {}]
  %s1 = inlined_call_operand.vmem [shape: f32[3,128], index: 1, kind: input, shape index: {}]
  %s2 = inlined_call_operand.vmem [shape: f32[1,128], index: 2, kind: input, shape index: {}]
  %s3 = inlined_call_operand.vmem [shape: bf16[128,512], index: 3, kind: input, shape index: {}]
  %s4 = inlined_call_operand.vmem [shape: f32[1,512], index: 4, kind: input, shape index: {}]
  %s5 = inlined_call_operand.vmem [shape: bf16[512,256], index: 5, kind: input, shape index: {}]
  %s6 = inlined_call_operand.vmem [shape: f32[1,256], index: 6, kind: input, shape index: {}]
  %s7 = inlined_call_operand.hbm [shape: f32[128,256], index: 7, kind: output, shape index: {}]
  %s8 = sld [smem:[#allocation0]]
  $region61: #{point_cloud_projector.1} parent=0
    _
  %s10 = ssub.s32 1, %s8
  %s11 = scalar_select 0, %s10, %s8
  $region1: #{point_cloud_projector.1} parent=0
    #allocation2 [shape = 'u8[131072]{0}', space=vmem, size = 0x20000, scoped, tag = 'output window, operand 0']
    #allocation3 [shape = 's32[2]{0}', space=sflag, size = 0x8, scoped, tag = 'scoped memory for point_cloud_projector.1']
    %12 = vsyncpa [#allocation3], 0
    %s13 = scalar_lea.sflag [#allocation3], 1
    %14 = vsyncpa %s13, 0
    loop: start=0, step=1, limit=4
    $region2: #{point_cloud_projector.1} parent=1 // loop_pre_header
      _
    $region3: #{point_cloud_projector.1} parent=1 // loop_header
      %s16 = sphi 0, %s20
      %p17 = scmp.ge.s32.totalorder %s16, 4
      %s26 = sphi 0, %s28
      %s29 = sphi 0, %s26
      %s30 = sphi 0, %s29
      %s46 = sphi 0, %s30
      %s50 = sphi 0, %s50
      %s52 = sphi 0, %s50
      %s53 = sphi 0, %s52
      %s67 = sphi 0, %s53
      %s71 = sphi 0, %s71
      %s73 = sphi 0, %s71
      %s74 = sphi 0, %s73
      %s88 = sphi 0, %s74
      %s92 = sphi 0, %s92
      %s94 = sphi 0, %s92
      %s95 = sphi 0, %s94
      %s109 = sphi 0, %s95
      %s113 = sphi 0, %s113
      %s115 = sphi 0, %s113
      %s116 = sphi 0, %s115
      %s130 = sphi 0, %s116
      %s134 = sphi 0, %s134
      %s136 = sphi 0, %s134
      %s137 = sphi 0, %s136
      %s151 = sphi 0, %s137
      %s155 = sphi 0, %s155
      %s157 = sphi 0, %s155
      %s158 = sphi 0, %s157
      %s172 = sphi 0, %s158
      %s178 = sphi 0, %s180
      %s181 = sphi 0, %s178
      %s182 = sphi 0, %s181
      %s198 = sphi 0, %s182
    $region4: #{point_cloud_projector.1} parent=1 // loop_header_branch
      %19 = sbr.rel (%p17) target = $region8
    $region5: #{point_cloud_projector.1} parent=1 // loop_body
      %s21 = ssub.s32 %s16, 1
      %s22 = ssub.s32 %s16, 2
      %s23 = sadd.s32 %s16, 1
      %s24 = ssub.s32 %s16, %s23
      %p25 = scmp.eq.s32.totalorder %s24, 0
      %s27 = sadd.s32 %s26, 1
      %s28 = scalar_select %p25, %s26, %s27
      %p31 = pneg %p25
      %p32 = scmp.eq.s32.totalorder %s16, 1
      %p33 = por %p31, %p32
      %p34 = scmp.ne.s32.totalorder %s26, %s29
      %p35 = scmp.eq.s32.totalorder %s16, 0
      %p36 = por %p34, %p35
      %p37 = scmp.ne.s32.totalorder %s26, %s29
      %p38 = scmp.eq.s32.totalorder %s21, 1
      %p39 = por %p37, %p38
      %p40 = scmp.ne.s32.totalorder %s29, %s30
      %p41 = scmp.eq.s32.totalorder %s21, 0
      %p42 = por %p40, %p41
      %p43 = scmp.ne.s32.totalorder %s29, %s30
      %p44 = scmp.eq.s32.totalorder %s22, 1
      %p45 = por %p43, %p44
      %p47 = scmp.ne.s32.totalorder %s30, %s46
      %p48 = scmp.eq.s32.totalorder %s22, 0
      %p49 = por %p47, %p48
      %s51 = sadd.s32 %s50, 1
      %p54 = scmp.eq.s32.totalorder %s16, 1
      %p55 = scmp.ne.s32.totalorder %s50, %s52
      %p56 = scmp.eq.s32.totalorder %s16, 0
      %p57 = por %p55, %p56
      %p58 = scmp.ne.s32.totalorder %s50, %s52
      %p59 = scmp.eq.s32.totalorder %s21, 1
      %p60 = por %p58, %p59
      %p61 = scmp.ne.s32.totalorder %s52, %s53
      %p62 = scmp.eq.s32.totalorder %s21, 0
      %p63 = por %p61, %p62
      %p64 = scmp.ne.s32.totalorder %s52, %s53
      %p65 = scmp.eq.s32.totalorder %s22, 1
      %p66 = por %p64, %p65
      %p68 = scmp.ne.s32.totalorder %s53, %s67
      %p69 = scmp.eq.s32.totalorder %s22, 0
      %p70 = por %p68, %p69
      %s72 = sadd.s32 %s71, 1
      %p75 = scmp.eq.s32.totalorder %s16, 1
      %p76 = scmp.ne.s32.totalorder %s71, %s73
      %p77 = scmp.eq.s32.totalorder %s16, 0
      %p78 = por %p76, %p77
      %p79 = scmp.ne.s32.totalorder %s71, %s73
      %p80 = scmp.eq.s32.totalorder %s21, 1
      %p81 = por %p79, %p80
      %p82 = scmp.ne.s32.totalorder %s73, %s74
      %p83 = scmp.eq.s32.totalorder %s21, 0
      %p84 = por %p82, %p83
      %p85 = scmp.ne.s32.totalorder %s73, %s74
      %p86 = scmp.eq.s32.totalorder %s22, 1
      %p87 = por %p85, %p86
      %p89 = scmp.ne.s32.totalorder %s74, %s88
      %p90 = scmp.eq.s32.totalorder %s22, 0
      %p91 = por %p89, %p90
      %s93 = sadd.s32 %s92, 1
      %p96 = scmp.eq.s32.totalorder %s16, 1
      %p97 = scmp.ne.s32.totalorder %s92, %s94
      %p98 = scmp.eq.s32.totalorder %s16, 0
      %p99 = por %p97, %p98
      %p100 = scmp.ne.s32.totalorder %s92, %s94
      %p101 = scmp.eq.s32.totalorder %s21, 1
      %p102 = por %p100, %p101
      %p103 = scmp.ne.s32.totalorder %s94, %s95
      %p104 = scmp.eq.s32.totalorder %s21, 0
      %p105 = por %p103, %p104
      %p106 = scmp.ne.s32.totalorder %s94, %s95
      %p107 = scmp.eq.s32.totalorder %s22, 1
      %p108 = por %p106, %p107
      %p110 = scmp.ne.s32.totalorder %s95, %s109
      %p111 = scmp.eq.s32.totalorder %s22, 0
      %p112 = por %p110, %p111
      %s114 = sadd.s32 %s113, 1
      %p117 = scmp.eq.s32.totalorder %s16, 1
      %p118 = scmp.ne.s32.totalorder %s113, %s115
      %p119 = scmp.eq.s32.totalorder %s16, 0
      %p120 = por %p118, %p119
      %p121 = scmp.ne.s32.totalorder %s113, %s115
      %p122 = scmp.eq.s32.totalorder %s21, 1
      %p123 = por %p121, %p122
      %p124 = scmp.ne.s32.totalorder %s115, %s116
      %p125 = scmp.eq.s32.totalorder %s21, 0
      %p126 = por %p124, %p125
      %p127 = scmp.ne.s32.totalorder %s115, %s116
      %p128 = scmp.eq.s32.totalorder %s22, 1
      %p129 = por %p127, %p128
      %p131 = scmp.ne.s32.totalorder %s116, %s130
      %p132 = scmp.eq.s32.totalorder %s22, 0
      %p133 = por %p131, %p132
      %s135 = sadd.s32 %s134, 1
      %p138 = scmp.eq.s32.totalorder %s16, 1
      %p139 = scmp.ne.s32.totalorder %s134, %s136
      %p140 = scmp.eq.s32.totalorder %s16, 0
      %p141 = por %p139, %p140
      %p142 = scmp.ne.s32.totalorder %s134, %s136
      %p143 = scmp.eq.s32.totalorder %s21, 1
      %p144 = por %p142, %p143
      %p145 = scmp.ne.s32.totalorder %s136, %s137
      %p146 = scmp.eq.s32.totalorder %s21, 0
      %p147 = por %p145, %p146
      %p148 = scmp.ne.s32.totalorder %s136, %s137
      %p149 = scmp.eq.s32.totalorder %s22, 1
      %p150 = por %p148, %p149
      %p152 = scmp.ne.s32.totalorder %s137, %s151
      %p153 = scmp.eq.s32.totalorder %s22, 0
      %p154 = por %p152, %p153
      %s156 = sadd.s32 %s155, 1
      %p159 = scmp.eq.s32.totalorder %s16, 1
      %p160 = scmp.ne.s32.totalorder %s155, %s157
      %p161 = scmp.eq.s32.totalorder %s16, 0
      %p162 = por %p160, %p161
      %p163 = scmp.ne.s32.totalorder %s155, %s157
      %p164 = scmp.eq.s32.totalorder %s21, 1
      %p165 = por %p163, %p164
      %p166 = scmp.ne.s32.totalorder %s157, %s158
      %p167 = scmp.eq.s32.totalorder %s21, 0
      %p168 = por %p166, %p167
      %p169 = scmp.ne.s32.totalorder %s157, %s158
      %p170 = scmp.eq.s32.totalorder %s22, 1
      %p171 = por %p169, %p170
      %p173 = scmp.ne.s32.totalorder %s158, %s172
      %p174 = scmp.eq.s32.totalorder %s22, 0
      %p175 = por %p173, %p174
      %s176 = ssub.s32 %s16, %s23
      %p177 = scmp.eq.s32.totalorder %s176, 0
      %s179 = sadd.s32 %s178, 1
      %s180 = scalar_select %p177, %s178, %s179
      %p183 = pneg %p177
      %p184 = scmp.eq.s32.totalorder %s16, 1
      %p185 = por %p183, %p184
      %p186 = scmp.ne.s32.totalorder %s178, %s181
      %p187 = scmp.eq.s32.totalorder %s16, 0
      %p188 = por %p186, %p187
      %p189 = scmp.ne.s32.totalorder %s178, %s181
      %p190 = scmp.eq.s32.totalorder %s21, 1
      %p191 = por %p189, %p190
      %p192 = scmp.ne.s32.totalorder %s181, %s182
      %p193 = scmp.eq.s32.totalorder %s21, 0
      %p194 = por %p192, %p193
      %p195 = scmp.ne.s32.totalorder %s181, %s182
      %p196 = scmp.eq.s32.totalorder %s22, 1
      %p197 = por %p195, %p196
      %p199 = scmp.ne.s32.totalorder %s182, %s198
      %p200 = scmp.eq.s32.totalorder %s22, 0
      %p201 = por %p199, %p200
      %p202 = scmp.le.s32.totalorder 1, %s16
      %p203 = scmp.lt.s32.totalorder %s16, 3
      %p204 = pnand %p202, %p203
      %p205 = pneg %p204
      // Predicated region
      $region9: #{point_cloud_projector.1} parent=5 // pred_check
        _
      $region10: #{point_cloud_projector.1} parent=5 // pred_check_branch
        %207 = sbr.rel (%p204) target = $region12
      $region11: #{point_cloud_projector.1} parent=5 // pred_region
        %s208 = ssub.s32 %s16, 1
        // Predicated region
        $region13: #{point_cloud_projector.1} parent=11 // pred_check
          %p209 = pneg %p63
        $region14: #{point_cloud_projector.1} parent=11 // pred_check_branch
          %211 = sbr.rel (%p209) target = $region16
        $region15: #{point_cloud_projector.1} parent=11 // pred_region
          _
        $region16: #{point_cloud_projector.1} parent=11 // pred_fallthru
          _
        // Predicated region
        $region17: #{point_cloud_projector.1} parent=11 // pred_check
          %p212 = pneg %p84
        $region18: #{point_cloud_projector.1} parent=11 // pred_check_branch
          %214 = sbr.rel (%p212) target = $region20
        $region19: #{point_cloud_projector.1} parent=11 // pred_region
          _
        $region20: #{point_cloud_projector.1} parent=11 // pred_fallthru
          _
        // Predicated region
        $region21: #{point_cloud_projector.1} parent=11 // pred_check
          %p215 = pneg %p105
        $region22: #{point_cloud_projector.1} parent=11 // pred_check_branch
          %217 = sbr.rel (%p215) target = $region24
        $region23: #{point_cloud_projector.1} parent=11 // pred_region
          _
        $region24: #{point_cloud_projector.1} parent=11 // pred_fallthru
          _
        // Predicated region
        $region25: #{point_cloud_projector.1} parent=11 // pred_check
          %p218 = pneg %p126
        $region26: #{point_cloud_projector.1} parent=11 // pred_check_branch
          %220 = sbr.rel (%p218) target = $region28
        $region27: #{point_cloud_projector.1} parent=11 // pred_region
          _
        $region28: #{point_cloud_projector.1} parent=11 // pred_fallthru
          _
        // Predicated region
        $region29: #{point_cloud_projector.1} parent=11 // pred_check
          %p221 = pneg %p147
        $region30: #{point_cloud_projector.1} parent=11 // pred_check_branch
          %223 = sbr.rel (%p221) target = $region32
        $region31: #{point_cloud_projector.1} parent=11 // pred_region
          _
        $region32: #{point_cloud_projector.1} parent=11 // pred_fallthru
          _
        // Predicated region
        $region33: #{point_cloud_projector.1} parent=11 // pred_check
          %p224 = pneg %p168
        $region34: #{point_cloud_projector.1} parent=11 // pred_check_branch
          %226 = sbr.rel (%p224) target = $region36
        $region35: #{point_cloud_projector.1} parent=11 // pred_region
          _
        $region36: #{point_cloud_projector.1} parent=11 // pred_fallthru
          _
      $region12: #{point_cloud_projector.1} parent=5 // pred_fallthru
        _
      %p227 = scmp.lt.s32.totalorder %s16, 2
      // Predicated region
      $region37: #{point_cloud_projector.1} parent=5 // pred_check
        %p228 = pneg %p227
      $region38: #{point_cloud_projector.1} parent=5 // pred_check_branch
        %230 = sbr.rel (%p228) target = $region40
      $region39: #{point_cloud_projector.1} parent=5 // pred_region
        // Predicated region
        $region41: #{point_cloud_projector.1} parent=39 // pred_check
          %p231 = pneg %p36
        $region42: #{point_cloud_projector.1} parent=39 // pred_check_branch
          %233 = sbr.rel (%p231) target = $region44
        $region43: #{point_cloud_projector.1} parent=39 // pred_region
          %s234 = smul.u32 8, %s16
          %p235 = scmp.lt.s32.totalorder %s234, 15
          %s236 = scalar_select %p235, %s234, 15
          %s237 = smul.addr %s236, 8
          %s238 = scalar_lea.vmem %s0, %s237
          %s239 = smul.u32 8, %s16
        $region44: #{point_cloud_projector.1} parent=39 // pred_fallthru
          _
      $region40: #{point_cloud_projector.1} parent=5 // pred_fallthru
        _
      %p240 = scmp.le.s32.totalorder 1, %s16
      %p241 = scmp.lt.s32.totalorder %s16, 3
      %p242 = pnand %p240, %p241
      %p243 = pneg %p242
      // Predicated region
      $region45: #{point_cloud_projector.1} parent=5 // pred_check
        _
      $region46: #{point_cloud_projector.1} parent=5 // pred_check_branch
        %245 = sbr.rel (%p242) target = $region48
      $region47: #{point_cloud_projector.1} parent=5 // pred_region
        %s246 = ssub.s32 %s16, 1
        %s247 = smul.u32 8, %s21
        %p248 = scmp.lt.s32.totalorder %s247, 15
        %s249 = scalar_select %p248, %s247, 15
        %s250 = smul.addr %s249, 8
        %s251 = scalar_lea.vmem %s0, %s250
        %p252 = pneg %p42
        %p253 = pneg %p39
        %p254 = pneg %p63
        %p255 = pneg %p60
        %p256 = pneg %p84
        %p257 = pneg %p81
        %p258 = pneg %p105
        %p259 = pneg %p102
        %p260 = pneg %p126
        %p261 = pneg %p123
        %p262 = pneg %p147
        %p263 = pneg %p144
        %p264 = pneg %p168
        %p265 = pneg %p165
        %p266 = pneg %p194
        %p267 = pneg %p191
        %s268 = sand.u32 %s181, 1
        %s269 = scalar_lea.sflag [#allocation3], %s268
        %s270 = sand.u32 %s181, 1
        %s271 = smul.addr %s270, 128
        %s272 = scalar_lea.vmem [#allocation2], %s271
        %s273 = smul.u32 8, %s21
        %p274 = scmp.lt.s32.totalorder %s273, 15
        %s275 = scalar_select %p274, %s273, 15
        %s276 = smul.addr %s275, 8
        %s277 = scalar_lea.vmem %s0, %s276
        %s278 = smul.u32 8, %s21
        %s279 = smul.u32 8, %s21
        %v281 = vld [vmem:[%s277] sm:$0xff]
        %v282 = vld [vmem:[%s277 + $0x8] sm:$0xff]
        %v283 = vld [vmem:[%s277 + $0x10] sm:$0xff]
        %v284 = vld [vmem:[%s277 + $0x18] sm:$0xff]
        %v285 = vld [vmem:[%s277 + $0x20] sm:$0xff]
        %v286 = vld [vmem:[%s277 + $0x28] sm:$0xff]
        %v287 = vld [vmem:[%s277 + $0x30] sm:$0xff]
        %v288 = vld [vmem:[%s277 + $0x38] sm:$0xff]
        %v289 = vld [vmem:[%s1] sm:$0x7]
        %291 = vset.pattern.permute.xlu0 0
        %292 = vperm.xlu0 %291, %v281
        %v293 = vpop.permute.xlu0 %292
        %296 = vset.pattern.permute.xlu0 0
        %297 = vperm.xlu0 %296, %v282
        %v298 = vpop.permute.xlu0 %297
        %301 = vset.pattern.permute.xlu0 0
        %302 = vperm.xlu0 %301, %v283
        %v303 = vpop.permute.xlu0 %302
        %306 = vset.pattern.permute.xlu0 0
        %307 = vperm.xlu0 %306, %v284
        %v308 = vpop.permute.xlu0 %307
        %311 = vset.pattern.permute.xlu0 0
        %312 = vperm.xlu0 %311, %v285
        %v313 = vpop.permute.xlu0 %312
        %316 = vset.pattern.permute.xlu0 0
        %317 = vperm.xlu0 %316, %v286
        %v318 = vpop.permute.xlu0 %317
        %321 = vset.pattern.permute.xlu0 0
        %322 = vperm.xlu0 %321, %v287
        %v323 = vpop.permute.xlu0 %322
        %326 = vset.pattern.permute.xlu0 0
        %327 = vperm.xlu0 %326, %v288
        %v328 = vpop.permute.xlu0 %327
        %v330 = vlaneseq
        %v331 = vshrl.u32 %v330, 7
        %v332 = vsub.s32 0, %v331
        %v333 = vrot.slane %v289, %v332
        %v334 = vmul.f32 %v293, %v333
        %v335 = vmul.f32 %v298, %v333
        %v336 = vmul.f32 %v303, %v333
        %v337 = vmul.f32 %v308, %v333
        %v338 = vmul.f32 %v313, %v333
        %v339 = vmul.f32 %v318, %v333
        %v340 = vmul.f32 %v323, %v333
        %v341 = vmul.f32 %v328, %v333
        %342 = vset.pattern.permute.xlu0 1
        %343 = vperm.xlu0 %342, %v281
        %v344 = vpop.permute.xlu0 %343
        %346 = vset.pattern.permute.xlu0 1
        %347 = vperm.xlu0 %346, %v282
        %v348 = vpop.permute.xlu0 %347
        %350 = vset.pattern.permute.xlu0 1
        %351 = vperm.xlu0 %350, %v283
        %v352 = vpop.permute.xlu0 %351
        %354 = vset.pattern.permute.xlu0 1
        %355 = vperm.xlu0 %354, %v284
        %v356 = vpop.permute.xlu0 %355
        %358 = vset.pattern.permute.xlu0 1
        %359 = vperm.xlu0 %358, %v285
        %v360 = vpop.permute.xlu0 %359
        %362 = vset.pattern.permute.xlu0 1
        %363 = vperm.xlu0 %362, %v286
        %v364 = vpop.permute.xlu0 %363
        %366 = vset.pattern.permute.xlu0 1
        %367 = vperm.xlu0 %366, %v287
        %v368 = vpop.permute.xlu0 %367
        %370 = vset.pattern.permute.xlu0 1
        %371 = vperm.xlu0 %370, %v288
        %v372 = vpop.permute.xlu0 %371
        %v374 = vlaneseq
        %v375 = vshrl.u32 %v374, 7
        %v376 = vsub.s32 1, %v375
        %v377 = vrot.slane %v289, %v376
        %v378 = vmul.f32 %v344, %v377
        %v379 = vmul.f32 %v348, %v377
        %v380 = vmul.f32 %v352, %v377
        %v381 = vmul.f32 %v356, %v377
        %v382 = vmul.f32 %v360, %v377
        %v383 = vmul.f32 %v364, %v377
        %v384 = vmul.f32 %v368, %v377
        %v385 = vmul.f32 %v372, %v377
        %v386 = vadd.f32 %v334, %v378
        %v387 = vadd.f32 %v335, %v379
        %v388 = vadd.f32 %v336, %v380
        %v389 = vadd.f32 %v337, %v381
        %v390 = vadd.f32 %v338, %v382
        %v391 = vadd.f32 %v339, %v383
        %v392 = vadd.f32 %v340, %v384
        %v393 = vadd.f32 %v341, %v385
        %394 = vset.pattern.permute.xlu0 2
        %395 = vperm.xlu0 %394, %v281
        %v396 = vpop.permute.xlu0 %395
        %398 = vset.pattern.permute.xlu0 2
        %399 = vperm.xlu0 %398, %v282
        %v400 = vpop.permute.xlu0 %399
        %402 = vset.pattern.permute.xlu0 2
        %403 = vperm.xlu0 %402, %v283
        %v404 = vpop.permute.xlu0 %403
        %406 = vset.pattern.permute.xlu0 2
        %407 = vperm.xlu0 %406, %v284
        %v408 = vpop.permute.xlu0 %407
        %410 = vset.pattern.permute.xlu0 2
        %411 = vperm.xlu0 %410, %v285
        %v412 = vpop.permute.xlu0 %411
        %414 = vset.pattern.permute.xlu0 2
        %415 = vperm.xlu0 %414, %v286
        %v416 = vpop.permute.xlu0 %415
        %418 = vset.pattern.permute.xlu0 2
        %419 = vperm.xlu0 %418, %v287
        %v420 = vpop.permute.xlu0 %419
        %422 = vset.pattern.permute.xlu0 2
        %423 = vperm.xlu0 %422, %v288
        %v424 = vpop.permute.xlu0 %423
        %v426 = vlaneseq
        %v427 = vshrl.u32 %v426, 7
        %v428 = vsub.s32 2, %v427
        %v429 = vrot.slane %v289, %v428
        %v430 = vmul.f32 %v396, %v429
        %v431 = vmul.f32 %v400, %v429
        %v432 = vmul.f32 %v404, %v429
        %v433 = vmul.f32 %v408, %v429
        %v434 = vmul.f32 %v412, %v429
        %v435 = vmul.f32 %v416, %v429
        %v436 = vmul.f32 %v420, %v429
        %v437 = vmul.f32 %v424, %v429
        %v438 = vadd.f32 %v386, %v430
        %v439 = vadd.f32 %v387, %v431
        %v440 = vadd.f32 %v388, %v432
        %v441 = vadd.f32 %v389, %v433
        %v442 = vadd.f32 %v390, %v434
        %v443 = vadd.f32 %v391, %v435
        %v444 = vadd.f32 %v392, %v436
        %v445 = vadd.f32 %v393, %v437
        %v446 = vld [vmem:[%s2] sm:$0x1]
        %v448 = vlaneseq
        %v449 = vshrl.u32 %v448, 7
        %v450 = vsub.s32 0, %v449
        %v451 = vrot.slane %v446, %v450
        %v453 = vadd.f32 %v438, %v451
        %v454 = vadd.f32 %v439, %v451
        %v455 = vadd.f32 %v440, %v451
        %v456 = vadd.f32 %v441, %v451
        %v457 = vadd.f32 %v442, %v451
        %v458 = vadd.f32 %v443, %v451
        %v459 = vadd.f32 %v444, %v451
        %v460 = vadd.f32 %v445, %v451
        %v461 = vmax.f32 %v453, 0.0
        %v462 = vmax.f32 %v454, 0.0
        %v463 = vmax.f32 %v455, 0.0
        %v464 = vmax.f32 %v456, 0.0
        %v465 = vmax.f32 %v457, 0.0
        %v466 = vmax.f32 %v458, 0.0
        %v467 = vmax.f32 %v459, 0.0
        %v468 = vmax.f32 %v460, 0.0
        %v469 = vpack.c.bf16 %v462, %v461
        %v470 = vpack.c.bf16 %v464, %v463
        %v471 = vpack.c.bf16 %v466, %v465
        %v472 = vpack.c.bf16 %v468, %v467
        %v473 = vld [vmem:[%s3] sm:$0xff]
        %v474 = vld [vmem:[%s3 + $0x8] sm:$0xff]
        %v475 = vld [vmem:[%s3 + $0x10] sm:$0xff]
        %v476 = vld [vmem:[%s3 + $0x18] sm:$0xff]
        %v477 = vld [vmem:[%s3 + $0x20] sm:$0xff]
        %v478 = vld [vmem:[%s3 + $0x28] sm:$0xff]
        %v479 = vld [vmem:[%s3 + $0x30] sm:$0xff]
        %v480 = vld [vmem:[%s3 + $0x38] sm:$0xff]
        %v481 = vld [vmem:[%s3 + $0x40] sm:$0xff]
        %v482 = vld [vmem:[%s3 + $0x48] sm:$0xff]
        %v483 = vld [vmem:[%s3 + $0x50] sm:$0xff]
        %v484 = vld [vmem:[%s3 + $0x58] sm:$0xff]
        %v485 = vld [vmem:[%s3 + $0x60] sm:$0xff]
        %v486 = vld [vmem:[%s3 + $0x68] sm:$0xff]
        %v487 = vld [vmem:[%s3 + $0x70] sm:$0xff]
        %v488 = vld [vmem:[%s3 + $0x78] sm:$0xff]
        %v489 = vld [vmem:[%s3 + $0x80] sm:$0xff]
        %v490 = vld [vmem:[%s3 + $0x88] sm:$0xff]
        %v491 = vld [vmem:[%s3 + $0x90] sm:$0xff]
        %v492 = vld [vmem:[%s3 + $0x98] sm:$0xff]
        %v493 = vld [vmem:[%s3 + $0xa0] sm:$0xff]
        %v494 = vld [vmem:[%s3 + $0xa8] sm:$0xff]
        %v495 = vld [vmem:[%s3 + $0xb0] sm:$0xff]
        %v496 = vld [vmem:[%s3 + $0xb8] sm:$0xff]
        %v497 = vld [vmem:[%s3 + $0xc0] sm:$0xff]
        %v498 = vld [vmem:[%s3 + $0xc8] sm:$0xff]
        %v499 = vld [vmem:[%s3 + $0xd0] sm:$0xff]
        %v500 = vld [vmem:[%s3 + $0xd8] sm:$0xff]
        %v501 = vld [vmem:[%s3 + $0xe0] sm:$0xff]
        %v502 = vld [vmem:[%s3 + $0xe8] sm:$0xff]
        %v503 = vld [vmem:[%s3 + $0xf0] sm:$0xff]
        %v504 = vld [vmem:[%s3 + $0xf8] sm:$0xff]
        %v505 = vld [vmem:[%s4] sm:$0xf]
        %v507 = vlaneseq
        %v508 = vshrl.u32 %v507, 7
        %v509 = vsub.s32 0, %v508
        %v510 = vrot.slane %v505, %v509
        %v511 = vlaneseq
        %v512 = vshrl.u32 %v511, 7
        %v513 = vsub.s32 1, %v512
        %v514 = vrot.slane %v505, %v513
        %v515 = vlaneseq
        %v516 = vshrl.u32 %v515, 7
        %v517 = vsub.s32 2, %v516
        %v518 = vrot.slane %v505, %v517
        %v519 = vlaneseq
        %v520 = vshrl.u32 %v519, 7
        %v521 = vsub.s32 3, %v520
        %v522 = vrot.slane %v505, %v521
        %v559 = vunpack.c.l.b16 %v473
        %v560 = vunpack.c.h.b16 %v473
        %v561 = vunpack.c.l.b16 %v474
        %v562 = vunpack.c.h.b16 %v474
        %v563 = vunpack.c.l.b16 %v475
        %v564 = vunpack.c.h.b16 %v475
        %v565 = vunpack.c.l.b16 %v476
        %v566 = vunpack.c.h.b16 %v476
        %v567 = vunpack.c.l.b16 %v477
        %v568 = vunpack.c.h.b16 %v477
        %v569 = vunpack.c.l.b16 %v478
        %v570 = vunpack.c.h.b16 %v478
        %v571 = vunpack.c.l.b16 %v479
        %v572 = vunpack.c.h.b16 %v479
        %v573 = vunpack.c.l.b16 %v480
        %v574 = vunpack.c.h.b16 %v480
        %v575 = vunpack.c.l.b16 %v481
        %v576 = vunpack.c.h.b16 %v481
        %v577 = vunpack.c.l.b16 %v482
        %v578 = vunpack.c.h.b16 %v482
        %v579 = vunpack.c.l.b16 %v483
        %v580 = vunpack.c.h.b16 %v483
        %v581 = vunpack.c.l.b16 %v484
        %v582 = vunpack.c.h.b16 %v484
        %v583 = vunpack.c.l.b16 %v485
        %v584 = vunpack.c.h.b16 %v485
        %v585 = vunpack.c.l.b16 %v486
        %v586 = vunpack.c.h.b16 %v486
        %v587 = vunpack.c.l.b16 %v487
        %v588 = vunpack.c.h.b16 %v487
        %v589 = vunpack.c.l.b16 %v488
        %v590 = vunpack.c.h.b16 %v488
        %v591 = vunpack.c.l.b16 %v489
        %v592 = vunpack.c.h.b16 %v489
        %v593 = vunpack.c.l.b16 %v490
        %v594 = vunpack.c.h.b16 %v490
        %v595 = vunpack.c.l.b16 %v491
        %v596 = vunpack.c.h.b16 %v491
        %v597 = vunpack.c.l.b16 %v492
        %v598 = vunpack.c.h.b16 %v492
        %v599 = vunpack.c.l.b16 %v493
        %v600 = vunpack.c.h.b16 %v493
        %v601 = vunpack.c.l.b16 %v494
        %v602 = vunpack.c.h.b16 %v494
        %v603 = vunpack.c.l.b16 %v495
        %v604 = vunpack.c.h.b16 %v495
        %v605 = vunpack.c.l.b16 %v496
        %v606 = vunpack.c.h.b16 %v496
        %v607 = vunpack.c.l.b16 %v497
        %v608 = vunpack.c.h.b16 %v497
        %v609 = vunpack.c.l.b16 %v498
        %v610 = vunpack.c.h.b16 %v498
        %v611 = vunpack.c.l.b16 %v499
        %v612 = vunpack.c.h.b16 %v499
        %v613 = vunpack.c.l.b16 %v500
        %v614 = vunpack.c.h.b16 %v500
        %v615 = vunpack.c.l.b16 %v501
        %v616 = vunpack.c.h.b16 %v501
        %v617 = vunpack.c.l.b16 %v502
        %v618 = vunpack.c.h.b16 %v502
        %v619 = vunpack.c.l.b16 %v503
        %v620 = vunpack.c.h.b16 %v503
        %v621 = vunpack.c.l.b16 %v504
        %v622 = vunpack.c.h.b16 %v504
        %v623 = vpack.c.b16 %v563, %v559
        %v624 = vpack.c.b16 %v564, %v560
        %v625 = vpack.c.b16 %v565, %v561
        %v626 = vpack.c.b16 %v566, %v562
        %v627 = vpack.c.b16 %v571, %v567
        %v628 = vpack.c.b16 %v572, %v568
        %v629 = vpack.c.b16 %v573, %v569
        %v630 = vpack.c.b16 %v574, %v570
        %v631 = vpack.c.b16 %v579, %v575
        %v632 = vpack.c.b16 %v580, %v576
        %v633 = vpack.c.b16 %v581, %v577
        %v634 = vpack.c.b16 %v582, %v578
        %v635 = vpack.c.b16 %v587, %v583
        %v636 = vpack.c.b16 %v588, %v584
        %v637 = vpack.c.b16 %v589, %v585
        %v638 = vpack.c.b16 %v590, %v586
        %v639 = vpack.c.b16 %v595, %v591
        %v640 = vpack.c.b16 %v596, %v592
        %v641 = vpack.c.b16 %v597, %v593
        %v642 = vpack.c.b16 %v598, %v594
        %v643 = vpack.c.b16 %v603, %v599
        %v644 = vpack.c.b16 %v604, %v600
        %v645 = vpack.c.b16 %v605, %v601
        %v646 = vpack.c.b16 %v606, %v602
        %v647 = vpack.c.b16 %v611, %v607
        %v648 = vpack.c.b16 %v612, %v608
        %v649 = vpack.c.b16 %v613, %v609
        %v650 = vpack.c.b16 %v614, %v610
        %v651 = vpack.c.b16 %v619, %v615
        %v652 = vpack.c.b16 %v620, %v616
        %v653 = vpack.c.b16 %v621, %v617
        %v654 = vpack.c.b16 %v622, %v618
        %687 = vmatprep.subr.bf16.mxu0 %v624
        %688 = vmatpush1.bf16.msra.mxu0 %v623
        %689 = vmatprep.subr.bf16.mxu0 %v628
        %690 = vmatpush1.bf16.msra.mxu0 %v627
        %691 = vmatprep.subr.bf16.mxu0 %v632
        %692 = vmatpush1.bf16.msra.mxu0 %v631
        %693 = vmatprep.subr.bf16.mxu0 %v636
        %694 = vmatpush1.bf16.msra.mxu0 %v635
        %695 = vmatprep.subr.bf16.mxu0 %v640
        %696 = vmatpush1.bf16.msra.mxu0 %v639
        %697 = vmatprep.subr.bf16.mxu0 %v644
        %698 = vmatpush1.bf16.msra.mxu0 %v643
        %699 = vmatprep.subr.bf16.mxu0 %v648
        %700 = vmatpush1.bf16.msra.mxu0 %v647
        %701 = vmatprep.subr.bf16.mxu0 %v652
        %702 = vmatpush1.bf16.msra.mxu0 %v651
        %703 = vmatprep.subr.bf16.mxu0 0
        %704 = vmatpush1.bf16.msra.mxu0 0
        %705 = vmatprep.subr.bf16.mxu0 0
        %706 = vmatpush1.bf16.msra.mxu0 0
        %707 = vmatprep.subr.bf16.mxu0 0
        %708 = vmatpush1.bf16.msra.mxu0 0
        %709 = vmatprep.subr.bf16.mxu0 0
        %710 = vmatpush1.bf16.msra.mxu0 0
        %711 = vmatprep.subr.bf16.mxu0 0
        %712 = vmatpush1.bf16.msra.mxu0 0
        %713 = vmatprep.subr.bf16.mxu0 0
        %714 = vmatpush1.bf16.msra.mxu0 0
        %715 = vmatprep.subr.bf16.mxu0 0
        %716 = vmatpush1.bf16.msra.mxu0 0
        %717 = vmatprep.subr.bf16.mxu0 0
        %718 = vmatpush1.bf16.msra.mxu0 0
        %719 = vmatprep.mubr.bf16.mxu0 0
        %720 = vmatmul.mubr.bf16.gmra.mrb[0].mxu0 %v469
        %v721 = vpop.f32.mrb[0].mxu0
        %v722 = vadd.f32 %v510, %v721
        %v723 = vpop.f32.mrb[0].mxu0
        %v724 = vadd.f32 %v514, %v723
        %v725 = vpop.f32.mrb[0].mxu0
        %v726 = vadd.f32 %v510, %v725
        %v727 = vpop.f32.mrb[0].mxu0
        %v728 = vadd.f32 %v514, %v727
        %729 = vmatprep.mubr.bf16.mxu0 0
        %730 = vmatmul.mubr.bf16.gmra.mrb[0].mxu0 %v470
        %v731 = vpop.f32.mrb[0].mxu0
        %v732 = vadd.f32 %v510, %v731
        %v733 = vpop.f32.mrb[0].mxu0
        %v734 = vadd.f32 %v514, %v733
        %v735 = vpop.f32.mrb[0].mxu0
        %v736 = vadd.f32 %v510, %v735
        %v737 = vpop.f32.mrb[0].mxu0
        %v738 = vadd.f32 %v514, %v737
        %739 = vmatprep.mubr.bf16.mxu0 0
        %740 = vmatmul.mubr.bf16.gmra.mrb[0].mxu0 %v471
        %v741 = vpop.f32.mrb[0].mxu0
        %v742 = vadd.f32 %v510, %v741
        %v743 = vpop.f32.mrb[0].mxu0
        %v744 = vadd.f32 %v514, %v743
        %v745 = vpop.f32.mrb[0].mxu0
        %v746 = vadd.f32 %v510, %v745
        %v747 = vpop.f32.mrb[0].mxu0
        %v748 = vadd.f32 %v514, %v747
        %749 = vmatprep.mubr.bf16.mxu0 0
        %750 = vmatmul.mubr.bf16.gmra.mrb[0].mxu0 %v472
        %v751 = vpop.f32.mrb[0].mxu0
        %v752 = vadd.f32 %v510, %v751
        %v753 = vpop.f32.mrb[0].mxu0
        %v754 = vadd.f32 %v514, %v753
        %v755 = vpop.f32.mrb[0].mxu0
        %v756 = vadd.f32 %v510, %v755
        %v757 = vpop.f32.mrb[0].mxu0
        %v758 = vadd.f32 %v514, %v757
        %759 = vdwg.mxu0
        %760 = vmatprep.subr.bf16.mxu0 %v626
        %761 = vmatpush1.bf16.msra.mxu0 %v625
        %762 = vmatprep.subr.bf16.mxu0 %v630
        %763 = vmatpush1.bf16.msra.mxu0 %v629
        %764 = vmatprep.subr.bf16.mxu0 %v634
        %765 = vmatpush1.bf16.msra.mxu0 %v633
        %766 = vmatprep.subr.bf16.mxu0 %v638
        %767 = vmatpush1.bf16.msra.mxu0 %v637
        %768 = vmatprep.subr.bf16.mxu0 %v642
        %769 = vmatpush1.bf16.msra.mxu0 %v641
        %770 = vmatprep.subr.bf16.mxu0 %v646
        %771 = vmatpush1.bf16.msra.mxu0 %v645
        %772 = vmatprep.subr.bf16.mxu0 %v650
        %773 = vmatpush1.bf16.msra.mxu0 %v649
        %774 = vmatprep.subr.bf16.mxu0 %v654
        %775 = vmatpush1.bf16.msra.mxu0 %v653
        %776 = vmatprep.subr.bf16.mxu0 0
        %777 = vmatpush1.bf16.msra.mxu0 0
        %778 = vmatprep.subr.bf16.mxu0 0
        %779 = vmatpush1.bf16.msra.mxu0 0
        %780 = vmatprep.subr.bf16.mxu0 0
        %781 = vmatpush1.bf16.msra.mxu0 0
        %782 = vmatprep.subr.bf16.mxu0 0
        %783 = vmatpush1.bf16.msra.mxu0 0
        %784 = vmatprep.subr.bf16.mxu0 0
        %785 = vmatpush1.bf16.msra.mxu0 0
        %786 = vmatprep.subr.bf16.mxu0 0
        %787 = vmatpush1.bf16.msra.mxu0 0
        %788 = vmatprep.subr.bf16.mxu0 0
        %789 = vmatpush1.bf16.msra.mxu0 0
        %790 = vmatprep.subr.bf16.mxu0 0
        %791 = vmatpush1.bf16.msra.mxu0 0
        %792 = vmatprep.mubr.bf16.mxu0 0
        %793 = vmatmul.mubr.bf16.gmra.mrb[0].mxu0 %v469
        %v794 = vpop.f32.mrb[0].mxu0
        %v795 = vadd.f32 %v518, %v794
        %v796 = vpop.f32.mrb[0].mxu0
        %v797 = vadd.f32 %v522, %v796
        %v798 = vpop.f32.mrb[0].mxu0
        %v799 = vadd.f32 %v518, %v798
        %v800 = vpop.f32.mrb[0].mxu0
        %v801 = vadd.f32 %v522, %v800
        %802 = vmatprep.mubr.bf16.mxu0 0
        %803 = vmatmul.mubr.bf16.gmra.mrb[0].mxu0 %v470
        %v804 = vpop.f32.mrb[0].mxu0
        %v805 = vadd.f32 %v518, %v804
        %v806 = vpop.f32.mrb[0].mxu0
        %v807 = vadd.f32 %v522, %v806
        %v808 = vpop.f32.mrb[0].mxu0
        %v809 = vadd.f32 %v518, %v808
        %v810 = vpop.f32.mrb[0].mxu0
        %v811 = vadd.f32 %v522, %v810
        %812 = vmatprep.mubr.bf16.mxu0 0
        %813 = vmatmul.mubr.bf16.gmra.mrb[0].mxu0 %v471
        %v814 = vpop.f32.mrb[0].mxu0
        %v815 = vadd.f32 %v518, %v814
        %v816 = vpop.f32.mrb[0].mxu0
        %v817 = vadd.f32 %v522, %v816
        %v818 = vpop.f32.mrb[0].mxu0
        %v819 = vadd.f32 %v518, %v818
        %v820 = vpop.f32.mrb[0].mxu0
        %v821 = vadd.f32 %v522, %v820
        %822 = vmatprep.mubr.bf16.mxu0 0
        %823 = vmatmul.mubr.bf16.gmra.mrb[0].mxu0 %v472
        %v824 = vpop.f32.mrb[0].mxu0
        %v825 = vadd.f32 %v518, %v824
        %v826 = vpop.f32.mrb[0].mxu0
        %v827 = vadd.f32 %v522, %v826
        %v828 = vpop.f32.mrb[0].mxu0
        %v829 = vadd.f32 %v518, %v828
        %v830 = vpop.f32.mrb[0].mxu0
        %v831 = vadd.f32 %v522, %v830
        %832 = vdwg.mxu0
        %v833 = vmax.f32 %v722, 0.0
        %v834 = vmax.f32 %v724, 0.0
        %v835 = vmax.f32 %v795, 0.0
        %v836 = vmax.f32 %v797, 0.0
        %v837 = vmax.f32 %v726, 0.0
        %v838 = vmax.f32 %v728, 0.0
        %v839 = vmax.f32 %v799, 0.0
        %v840 = vmax.f32 %v801, 0.0
        %v841 = vmax.f32 %v732, 0.0
        %v842 = vmax.f32 %v734, 0.0
        %v843 = vmax.f32 %v805, 0.0
        %v844 = vmax.f32 %v807, 0.0
        %v845 = vmax.f32 %v736, 0.0
        %v846 = vmax.f32 %v738, 0.0
        %v847 = vmax.f32 %v809, 0.0
        %v848 = vmax.f32 %v811, 0.0
        %v849 = vmax.f32 %v742, 0.0
        %v850 = vmax.f32 %v744, 0.0
        %v851 = vmax.f32 %v815, 0.0
        %v852 = vmax.f32 %v817, 0.0
        %v853 = vmax.f32 %v746, 0.0
        %v854 = vmax.f32 %v748, 0.0
        %v855 = vmax.f32 %v819, 0.0
        %v856 = vmax.f32 %v821, 0.0
        %v857 = vmax.f32 %v752, 0.0
        %v858 = vmax.f32 %v754, 0.0
        %v859 = vmax.f32 %v825, 0.0
        %v860 = vmax.f32 %v827, 0.0
        %v861 = vmax.f32 %v756, 0.0
        %v862 = vmax.f32 %v758, 0.0
        %v863 = vmax.f32 %v829, 0.0
        %v864 = vmax.f32 %v831, 0.0
        %v865 = vpack.c.bf16 %v837, %v833
        %v866 = vpack.c.bf16 %v838, %v834
        %v867 = vpack.c.bf16 %v839, %v835
        %v868 = vpack.c.bf16 %v840, %v836
        %v869 = vpack.c.bf16 %v845, %v841
        %v870 = vpack.c.bf16 %v846, %v842
        %v871 = vpack.c.bf16 %v847, %v843
        %v872 = vpack.c.bf16 %v848, %v844
        %v873 = vpack.c.bf16 %v853, %v849
        %v874 = vpack.c.bf16 %v854, %v850
        %v875 = vpack.c.bf16 %v855, %v851
        %v876 = vpack.c.bf16 %v856, %v852
        %v877 = vpack.c.bf16 %v861, %v857
        %v878 = vpack.c.bf16 %v862, %v858
        %v879 = vpack.c.bf16 %v863, %v859
        %v880 = vpack.c.bf16 %v864, %v860
        %v881 = vld [vmem:[%s5] sm:$0xff]
        %v882 = vld [vmem:[%s5 + $0x8] sm:$0xff]
        %v883 = vld [vmem:[%s5 + $0x10] sm:$0xff]
        %v884 = vld [vmem:[%s5 + $0x18] sm:$0xff]
        %v885 = vld [vmem:[%s5 + $0x20] sm:$0xff]
        %v886 = vld [vmem:[%s5 + $0x28] sm:$0xff]
        %v887 = vld [vmem:[%s5 + $0x30] sm:$0xff]
        %v888 = vld [vmem:[%s5 + $0x38] sm:$0xff]
        %v889 = vld [vmem:[%s5 + $0x40] sm:$0xff]
        %v890 = vld [vmem:[%s5 + $0x48] sm:$0xff]
        %v891 = vld [vmem:[%s5 + $0x50] sm:$0xff]
        %v892 = vld [vmem:[%s5 + $0x58] sm:$0xff]
        %v893 = vld [vmem:[%s5 + $0x60] sm:$0xff]
        %v894 = vld [vmem:[%s5 + $0x68] sm:$0xff]
        %v895 = vld [vmem:[%s5 + $0x70] sm:$0xff]
        %v896 = vld [vmem:[%s5 + $0x78] sm:$0xff]
        %v897 = vld [vmem:[%s5 + $0x80] sm:$0xff]
        %v898 = vld [vmem:[%s5 + $0x88] sm:$0xff]
        %v899 = vld [vmem:[%s5 + $0x90] sm:$0xff]
        %v900 = vld [vmem:[%s5 + $0x98] sm:$0xff]
        %v901 = vld [vmem:[%s5 + $0xa0] sm:$0xff]
        %v902 = vld [vmem:[%s5 + $0xa8] sm:$0xff]
        %v903 = vld [vmem:[%s5 + $0xb0] sm:$0xff]
        %v904 = vld [vmem:[%s5 + $0xb8] sm:$0xff]
        %v905 = vld [vmem:[%s5 + $0xc0] sm:$0xff]
        %v906 = vld [vmem:[%s5 + $0xc8] sm:$0xff]
        %v907 = vld [vmem:[%s5 + $0xd0] sm:$0xff]
        %v908 = vld [vmem:[%s5 + $0xd8] sm:$0xff]
        %v909 = vld [vmem:[%s5 + $0xe0] sm:$0xff]
        %v910 = vld [vmem:[%s5 + $0xe8] sm:$0xff]
        %v911 = vld [vmem:[%s5 + $0xf0] sm:$0xff]
        %v912 = vld [vmem:[%s5 + $0xf8] sm:$0xff]
        %v913 = vld [vmem:[%s5 + $0x100] sm:$0xff]
        %v914 = vld [vmem:[%s5 + $0x108] sm:$0xff]
        %v915 = vld [vmem:[%s5 + $0x110] sm:$0xff]
        %v916 = vld [vmem:[%s5 + $0x118] sm:$0xff]
        %v917 = vld [vmem:[%s5 + $0x120] sm:$0xff]
        %v918 = vld [vmem:[%s5 + $0x128] sm:$0xff]
        %v919 = vld [vmem:[%s5 + $0x130] sm:$0xff]
        %v920 = vld [vmem:[%s5 + $0x138] sm:$0xff]
        %v921 = vld [vmem:[%s5 + $0x140] sm:$0xff]
        %v922 = vld [vmem:[%s5 + $0x148] sm:$0xff]
        %v923 = vld [vmem:[%s5 + $0x150] sm:$0xff]
        %v924 = vld [vmem:[%s5 + $0x158] sm:$0xff]
        %v925 = vld [vmem:[%s5 + $0x160] sm:$0xff]
        %v926 = vld [vmem:[%s5 + $0x168] sm:$0xff]
        %v927 = vld [vmem:[%s5 + $0x170] sm:$0xff]
        %v928 = vld [vmem:[%s5 + $0x178] sm:$0xff]
        %v929 = vld [vmem:[%s5 + $0x180] sm:$0xff]
        %v930 = vld [vmem:[%s5 + $0x188] sm:$0xff]
        %v931 = vld [vmem:[%s5 + $0x190] sm:$0xff]
        %v932 = vld [vmem:[%s5 + $0x198] sm:$0xff]
        %v933 = vld [vmem:[%s5 + $0x1a0] sm:$0xff]
        %v934 = vld [vmem:[%s5 + $0x1a8] sm:$0xff]
        %v935 = vld [vmem:[%s5 + $0x1b0] sm:$0xff]
        %v936 = vld [vmem:[%s5 + $0x1b8] sm:$0xff]
        %v937 = vld [vmem:[%s5 + $0x1c0] sm:$0xff]
        %v938 = vld [vmem:[%s5 + $0x1c8] sm:$0xff]
        %v939 = vld [vmem:[%s5 + $0x1d0] sm:$0xff]
        %v940 = vld [vmem:[%s5 + $0x1d8] sm:$0xff]
        %v941 = vld [vmem:[%s5 + $0x1e0] sm:$0xff]
        %v942 = vld [vmem:[%s5 + $0x1e8] sm:$0xff]
        %v943 = vld [vmem:[%s5 + $0x1f0] sm:$0xff]
        %v944 = vld [vmem:[%s5 + $0x1f8] sm:$0xff]
        %v945 = vld [vmem:[%s6] sm:$0x3]
        %v947 = vlaneseq
        %v948 = vshrl.u32 %v947, 7
        %v949 = vsub.s32 0, %v948
        %v950 = vrot.slane %v945, %v949
        %v951 = vlaneseq
        %v952 = vshrl.u32 %v951, 7
        %v953 = vsub.s32 1, %v952
        %v954 = vrot.slane %v945, %v953
        %v1021 = vunpack.c.l.b16 %v881
        %v1022 = vunpack.c.h.b16 %v881
        %v1023 = vunpack.c.l.b16 %v882
        %v1024 = vunpack.c.h.b16 %v882
        %v1025 = vunpack.c.l.b16 %v883
        %v1026 = vunpack.c.h.b16 %v883
        %v1027 = vunpack.c.l.b16 %v884
        %v1028 = vunpack.c.h.b16 %v884
        %v1029 = vunpack.c.l.b16 %v885
        %v1030 = vunpack.c.h.b16 %v885
        %v1031 = vunpack.c.l.b16 %v886
        %v1032 = vunpack.c.h.b16 %v886
        %v1033 = vunpack.c.l.b16 %v887
        %v1034 = vunpack.c.h.b16 %v887
        %v1035 = vunpack.c.l.b16 %v888
        %v1036 = vunpack.c.h.b16 %v888
        %v1037 = vunpack.c.l.b16 %v889
        %v1038 = vunpack.c.h.b16 %v889
        %v1039 = vunpack.c.l.b16 %v890
        %v1040 = vunpack.c.h.b16 %v890
        %v1041 = vunpack.c.l.b16 %v891
        %v1042 = vunpack.c.h.b16 %v891
        %v1043 = vunpack.c.l.b16 %v892
        %v1044 = vunpack.c.h.b16 %v892
        %v1045 = vunpack.c.l.b16 %v893
        %v1046 = vunpack.c.h.b16 %v893
        %v1047 = vunpack.c.l.b16 %v894
        %v1048 = vunpack.c.h.b16 %v894
        %v1049 = vunpack.c.l.b16 %v895
        %v1050 = vunpack.c.h.b16 %v895
        %v1051 = vunpack.c.l.b16 %v896
        %v1052 = vunpack.c.h.b16 %v896
        %v1053 = vunpack.c.l.b16 %v897
        %v1054 = vunpack.c.h.b16 %v897
        %v1055 = vunpack.c.l.b16 %v898
        %v1056 = vunpack.c.h.b16 %v898
        %v1057 = vunpack.c.l.b16 %v899
        %v1058 = vunpack.c.h.b16 %v899
        %v1059 = vunpack.c.l.b16 %v900
        %v1060 = vunpack.c.h.b16 %v900
        %v1061 = vunpack.c.l.b16 %v901
        %v1062 = vunpack.c.h.b16 %v901
        %v1063 = vunpack.c.l.b16 %v902
        %v1064 = vunpack.c.h.b16 %v902
        %v1065 = vunpack.c.l.b16 %v903
        %v1066 = vunpack.c.h.b16 %v903
        %v1067 = vunpack.c.l.b16 %v904
        %v1068 = vunpack.c.h.b16 %v904
        %v1069 = vunpack.c.l.b16 %v905
        %v1070 = vunpack.c.h.b16 %v905
        %v1071 = vunpack.c.l.b16 %v906
        %v1072 = vunpack.c.h.b16 %v906
        %v1073 = vunpack.c.l.b16 %v907
        %v1074 = vunpack.c.h.b16 %v907
        %v1075 = vunpack.c.l.b16 %v908
        %v1076 = vunpack.c.h.b16 %v908
        %v1077 = vunpack.c.l.b16 %v909
        %v1078 = vunpack.c.h.b16 %v909
        %v1079 = vunpack.c.l.b16 %v910
        %v1080 = vunpack.c.h.b16 %v910
        %v1081 = vunpack.c.l.b16 %v911
        %v1082 = vunpack.c.h.b16 %v911
        %v1083 = vunpack.c.l.b16 %v912
        %v1084 = vunpack.c.h.b16 %v912
        %v1085 = vunpack.c.l.b16 %v913
        %v1086 = vunpack.c.h.b16 %v913
        %v1087 = vunpack.c.l.b16 %v914
        %v1088 = vunpack.c.h.b16 %v914
        %v1089 = vunpack.c.l.b16 %v915
        %v1090 = vunpack.c.h.b16 %v915
        %v1091 = vunpack.c.l.b16 %v916
        %v1092 = vunpack.c.h.b16 %v916
        %v1093 = vunpack.c.l.b16 %v917
        %v1094 = vunpack.c.h.b16 %v917
        %v1095 = vunpack.c.l.b16 %v918
        %v1096 = vunpack.c.h.b16 %v918
        %v1097 = vunpack.c.l.b16 %v919
        %v1098 = vunpack.c.h.b16 %v919
        %v1099 = vunpack.c.l.b16 %v920
        %v1100 = vunpack.c.h.b16 %v920
        %v1101 = vunpack.c.l.b16 %v921
        %v1102 = vunpack.c.h.b16 %v921
        %v1103 = vunpack.c.l.b16 %v922
        %v1104 = vunpack.c.h.b16 %v922
        %v1105 = vunpack.c.l.b16 %v923
        %v1106 = vunpack.c.h.b16 %v923
        %v1107 = vunpack.c.l.b16 %v924
        %v1108 = vunpack.c.h.b16 %v924
        %v1109 = vunpack.c.l.b16 %v925
        %v1110 = vunpack.c.h.b16 %v925
        %v1111 = vunpack.c.l.b16 %v926
        %v1112 = vunpack.c.h.b16 %v926
        %v1113 = vunpack.c.l.b16 %v927
        %v1114 = vunpack.c.h.b16 %v927
        %v1115 = vunpack.c.l.b16 %v928
        %v1116 = vunpack.c.h.b16 %v928
        %v1117 = vunpack.c.l.b16 %v929
        %v1118 = vunpack.c.h.b16 %v929
        %v1119 = vunpack.c.l.b16 %v930
        %v1120 = vunpack.c.h.b16 %v930
        %v1121 = vunpack.c.l.b16 %v931
        %v1122 = vunpack.c.h.b16 %v931
        %v1123 = vunpack.c.l.b16 %v932
        %v1124 = vunpack.c.h.b16 %v932
        %v1125 = vunpack.c.l.b16 %v933
        %v1126 = vunpack.c.h.b16 %v933
        %v1127 = vunpack.c.l.b16 %v934
        %v1128 = vunpack.c.h.b16 %v934
        %v1129 = vunpack.c.l.b16 %v935
        %v1130 = vunpack.c.h.b16 %v935
        %v1131 = vunpack.c.l.b16 %v936
        %v1132 = vunpack.c.h.b16 %v936
        %v1133 = vunpack.c.l.b16 %v937
        %v1134 = vunpack.c.h.b16 %v937
        %v1135 = vunpack.c.l.b16 %v938
        %v1136 = vunpack.c.h.b16 %v938
        %v1137 = vunpack.c.l.b16 %v939
        %v1138 = vunpack.c.h.b16 %v939
        %v1139 = vunpack.c.l.b16 %v940
        %v1140 = vunpack.c.h.b16 %v940
        %v1141 = vunpack.c.l.b16 %v941
        %v1142 = vunpack.c.h.b16 %v941
        %v1143 = vunpack.c.l.b16 %v942
        %v1144 = vunpack.c.h.b16 %v942
        %v1145 = vunpack.c.l.b16 %v943
        %v1146 = vunpack.c.h.b16 %v943
        %v1147 = vunpack.c.l.b16 %v944
        %v1148 = vunpack.c.h.b16 %v944
        %v1149 = vpack.c.b16 %v1023, %v1021
        %v1150 = vpack.c.b16 %v1024, %v1022
        %v1151 = vpack.c.b16 %v1027, %v1025
        %v1152 = vpack.c.b16 %v1028, %v1026
        %v1153 = vpack.c.b16 %v1031, %v1029
        %v1154 = vpack.c.b16 %v1032, %v1030
        %v1155 = vpack.c.b16 %v1035, %v1033
        %v1156 = vpack.c.b16 %v1036, %v1034
        %v1157 = vpack.c.b16 %v1039, %v1037
        %v1158 = vpack.c.b16 %v1040, %v1038
        %v1159 = vpack.c.b16 %v1043, %v1041
        %v1160 = vpack.c.b16 %v1044, %v1042
        %v1161 = vpack.c.b16 %v1047, %v1045
        %v1162 = vpack.c.b16 %v1048, %v1046
        %v1163 = vpack.c.b16 %v1051, %v1049
        %v1164 = vpack.c.b16 %v1052, %v1050
        %v1165 = vpack.c.b16 %v1055, %v1053
        %v1166 = vpack.c.b16 %v1056, %v1054
        %v1167 = vpack.c.b16 %v1059, %v1057
        %v1168 = vpack.c.b16 %v1060, %v1058
        %v1169 = vpack.c.b16 %v1063, %v1061
        %v1170 = vpack.c.b16 %v1064, %v1062
        %v1171 = vpack.c.b16 %v1067, %v1065
        %v1172 = vpack.c.b16 %v1068, %v1066
        %v1173 = vpack.c.b16 %v1071, %v1069
        %v1174 = vpack.c.b16 %v1072, %v1070
        %v1175 = vpack.c.b16 %v1075, %v1073
        %v1176 = vpack.c.b16 %v1076, %v1074
        %v1177 = vpack.c.b16 %v1079, %v1077
        %v1178 = vpack.c.b16 %v1080, %v1078
        %v1179 = vpack.c.b16 %v1083, %v1081
        %v1180 = vpack.c.b16 %v1084, %v1082
        %v1181 = vpack.c.b16 %v1087, %v1085
        %v1182 = vpack.c.b16 %v1088, %v1086
        %v1183 = vpack.c.b16 %v1091, %v1089
        %v1184 = vpack.c.b16 %v1092, %v1090
        %v1185 = vpack.c.b16 %v1095, %v1093
        %v1186 = vpack.c.b16 %v1096, %v1094
        %v1187 = vpack.c.b16 %v1099, %v1097
        %v1188 = vpack.c.b16 %v1100, %v1098
        %v1189 = vpack.c.b16 %v1103, %v1101
        %v1190 = vpack.c.b16 %v1104, %v1102
        %v1191 = vpack.c.b16 %v1107, %v1105
        %v1192 = vpack.c.b16 %v1108, %v1106
        %v1193 = vpack.c.b16 %v1111, %v1109
        %v1194 = vpack.c.b16 %v1112, %v1110
        %v1195 = vpack.c.b16 %v1115, %v1113
        %v1196 = vpack.c.b16 %v1116, %v1114
        %v1197 = vpack.c.b16 %v1119, %v1117
        %v1198 = vpack.c.b16 %v1120, %v1118
        %v1199 = vpack.c.b16 %v1123, %v1121
        %v1200 = vpack.c.b16 %v1124, %v1122
        %v1201 = vpack.c.b16 %v1127, %v1125
        %v1202 = vpack.c.b16 %v1128, %v1126
        %v1203 = vpack.c.b16 %v1131, %v1129
        %v1204 = vpack.c.b16 %v1132, %v1130
        %v1205 = vpack.c.b16 %v1135, %v1133
        %v1206 = vpack.c.b16 %v1136, %v1134
        %v1207 = vpack.c.b16 %v1139, %v1137
        %v1208 = vpack.c.b16 %v1140, %v1138
        %v1209 = vpack.c.b16 %v1143, %v1141
        %v1210 = vpack.c.b16 %v1144, %v1142
        %v1211 = vpack.c.b16 %v1147, %v1145
        %v1212 = vpack.c.b16 %v1148, %v1146
        %1277 = vmatprep.subr.bf16.mxu0 %v1150
        %1278 = vmatpush1.bf16.msra.mxu0 %v1149
        %1279 = vmatprep.subr.bf16.mxu0 %v1152
        %1280 = vmatpush1.bf16.msra.mxu0 %v1151
        %1281 = vmatprep.subr.bf16.mxu0 %v1154
        %1282 = vmatpush1.bf16.msra.mxu0 %v1153
        %1283 = vmatprep.subr.bf16.mxu0 %v1156
        %1284 = vmatpush1.bf16.msra.mxu0 %v1155
        %1285 = vmatprep.subr.bf16.mxu0 %v1158
        %1286 = vmatpush1.bf16.msra.mxu0 %v1157
        %1287 = vmatprep.subr.bf16.mxu0 %v1160
        %1288 = vmatpush1.bf16.msra.mxu0 %v1159
        %1289 = vmatprep.subr.bf16.mxu0 %v1162
        %1290 = vmatpush1.bf16.msra.mxu0 %v1161
        %1291 = vmatprep.subr.bf16.mxu0 %v1164
        %1292 = vmatpush1.bf16.msra.mxu0 %v1163
        %1293 = vmatprep.subr.bf16.mxu0 %v1166
        %1294 = vmatpush1.bf16.msra.mxu0 %v1165
        %1295 = vmatprep.subr.bf16.mxu0 %v1168
        %1296 = vmatpush1.bf16.msra.mxu0 %v1167
        %1297 = vmatprep.subr.bf16.mxu0 %v1170
        %1298 = vmatpush1.bf16.msra.mxu0 %v1169
        %1299 = vmatprep.subr.bf16.mxu0 %v1172
        %1300 = vmatpush1.bf16.msra.mxu0 %v1171
        %1301 = vmatprep.subr.bf16.mxu0 %v1174
        %1302 = vmatpush1.bf16.msra.mxu0 %v1173
        %1303 = vmatprep.subr.bf16.mxu0 %v1176
        %1304 = vmatpush1.bf16.msra.mxu0 %v1175
        %1305 = vmatprep.subr.bf16.mxu0 %v1178
        %1306 = vmatpush1.bf16.msra.mxu0 %v1177
        %1307 = vmatprep.subr.bf16.mxu0 %v1180
        %1308 = vmatpush1.bf16.msra.mxu0 %v1179
        %1309 = vmatprep.mubr.bf16.mxu0 %v866
        %1310 = vmatmul.mubr.bf16.gmra.mrb[0].mxu0 %v865
        %v1311 = vpop.f32.mrb[0].mxu0
        %v1312 = vadd.f32 %v950, %v1311
        %v1313 = vpop.f32.mrb[0].mxu0
        %v1314 = vadd.f32 %v954, %v1313
        %v1315 = vpop.f32.mrb[0].mxu0
        %v1316 = vadd.f32 %v950, %v1315
        %v1317 = vpop.f32.mrb[0].mxu0
        %v1318 = vadd.f32 %v954, %v1317
        %1319 = vmatprep.mubr.bf16.mxu0 %v870
        %1320 = vmatmul.mubr.bf16.gmra.mrb[0].mxu0 %v869
        %v1321 = vpop.f32.mrb[0].mxu0
        %v1322 = vadd.f32 %v950, %v1321
        %v1323 = vpop.f32.mrb[0].mxu0
        %v1324 = vadd.f32 %v954, %v1323
        %v1325 = vpop.f32.mrb[0].mxu0
        %v1326 = vadd.f32 %v950, %v1325
        %v1327 = vpop.f32.mrb[0].mxu0
        %v1328 = vadd.f32 %v954, %v1327
        %1329 = vmatprep.mubr.bf16.mxu0 %v874
        %1330 = vmatmul.mubr.bf16.gmra.mrb[0].mxu0 %v873
        %v1331 = vpop.f32.mrb[0].mxu0
        %v1332 = vadd.f32 %v950, %v1331
        %v1333 = vpop.f32.mrb[0].mxu0
        %v1334 = vadd.f32 %v954, %v1333
        %v1335 = vpop.f32.mrb[0].mxu0
        %v1336 = vadd.f32 %v950, %v1335
        %v1337 = vpop.f32.mrb[0].mxu0
        %v1338 = vadd.f32 %v954, %v1337
        %1339 = vmatprep.mubr.bf16.mxu0 %v878
        %1340 = vmatmul.mubr.bf16.gmra.mrb[0].mxu0 %v877
        %v1341 = vpop.f32.mrb[0].mxu0
        %v1342 = vadd.f32 %v950, %v1341
        %v1343 = vpop.f32.mrb[0].mxu0
        %v1344 = vadd.f32 %v954, %v1343
        %v1345 = vpop.f32.mrb[0].mxu0
        %v1346 = vadd.f32 %v950, %v1345
        %v1347 = vpop.f32.mrb[0].mxu0
        %v1348 = vadd.f32 %v954, %v1347
        %1349 = vdwg.mxu0
        %1350 = vmatprep.subr.bf16.mxu0 %v1182
        %1351 = vmatpush1.bf16.msra.mxu0 %v1181
        %1352 = vmatprep.subr.bf16.mxu0 %v1184
        %1353 = vmatpush1.bf16.msra.mxu0 %v1183
        %1354 = vmatprep.subr.bf16.mxu0 %v1186
        %1355 = vmatpush1.bf16.msra.mxu0 %v1185
        %1356 = vmatprep.subr.bf16.mxu0 %v1188
        %1357 = vmatpush1.bf16.msra.mxu0 %v1187
        %1358 = vmatprep.subr.bf16.mxu0 %v1190
        %1359 = vmatpush1.bf16.msra.mxu0 %v1189
        %1360 = vmatprep.subr.bf16.mxu0 %v1192
        %1361 = vmatpush1.bf16.msra.mxu0 %v1191
        %1362 = vmatprep.subr.bf16.mxu0 %v1194
        %1363 = vmatpush1.bf16.msra.mxu0 %v1193
        %1364 = vmatprep.subr.bf16.mxu0 %v1196
        %1365 = vmatpush1.bf16.msra.mxu0 %v1195
        %1366 = vmatprep.subr.bf16.mxu0 %v1198
        %1367 = vmatpush1.bf16.msra.mxu0 %v1197
        %1368 = vmatprep.subr.bf16.mxu0 %v1200
        %1369 = vmatpush1.bf16.msra.mxu0 %v1199
        %1370 = vmatprep.subr.bf16.mxu0 %v1202
        %1371 = vmatpush1.bf16.msra.mxu0 %v1201
        %1372 = vmatprep.subr.bf16.mxu0 %v1204
        %1373 = vmatpush1.bf16.msra.mxu0 %v1203
        %1374 = vmatprep.subr.bf16.mxu0 %v1206
        %1375 = vmatpush1.bf16.msra.mxu0 %v1205
        %1376 = vmatprep.subr.bf16.mxu0 %v1208
        %1377 = vmatpush1.bf16.msra.mxu0 %v1207
        %1378 = vmatprep.subr.bf16.mxu0 %v1210
        %1379 = vmatpush1.bf16.msra.mxu0 %v1209
        %1380 = vmatprep.subr.bf16.mxu0 %v1212
        %1381 = vmatpush1.bf16.msra.mxu0 %v1211
        %1382 = vmatprep.mubr.bf16.mxu0 %v868
        %1383 = vmatmul.mubr.bf16.gmra.mrb[0].mxu0 %v867
        %v1384 = vpop.f32.mrb[0].mxu0
        %v1385 = vadd.f32 %v1312, %v1384
        %v1386 = vpop.f32.mrb[0].mxu0
        %v1387 = vadd.f32 %v1314, %v1386
        %v1388 = vpop.f32.mrb[0].mxu0
        %v1389 = vadd.f32 %v1316, %v1388
        %v1390 = vpop.f32.mrb[0].mxu0
        %v1391 = vadd.f32 %v1318, %v1390
        %1392 = vmatprep.mubr.bf16.mxu0 %v872
        %1393 = vmatmul.mubr.bf16.gmra.mrb[0].mxu0 %v871
        %v1394 = vpop.f32.mrb[0].mxu0
        %v1395 = vadd.f32 %v1322, %v1394
        %v1396 = vpop.f32.mrb[0].mxu0
        %v1397 = vadd.f32 %v1324, %v1396
        %v1398 = vpop.f32.mrb[0].mxu0
        %v1399 = vadd.f32 %v1326, %v1398
        %v1400 = vpop.f32.mrb[0].mxu0
        %v1401 = vadd.f32 %v1328, %v1400
        %1402 = vmatprep.mubr.bf16.mxu0 %v876
        %1403 = vmatmul.mubr.bf16.gmra.mrb[0].mxu0 %v875
        %v1404 = vpop.f32.mrb[0].mxu0
        %v1405 = vadd.f32 %v1332, %v1404
        %v1406 = vpop.f32.mrb[0].mxu0
        %v1407 = vadd.f32 %v1334, %v1406
        %v1408 = vpop.f32.mrb[0].mxu0
        %v1409 = vadd.f32 %v1336, %v1408
        %v1410 = vpop.f32.mrb[0].mxu0
        %v1411 = vadd.f32 %v1338, %v1410
        %1412 = vmatprep.mubr.bf16.mxu0 %v880
        %1413 = vmatmul.mubr.bf16.gmra.mrb[0].mxu0 %v879
        %v1414 = vpop.f32.mrb[0].mxu0
        %v1415 = vadd.f32 %v1342, %v1414
        %v1416 = vpop.f32.mrb[0].mxu0
        %v1417 = vadd.f32 %v1344, %v1416
        %v1418 = vpop.f32.mrb[0].mxu0
        %v1419 = vadd.f32 %v1346, %v1418
        %v1420 = vpop.f32.mrb[0].mxu0
        %v1421 = vadd.f32 %v1348, %v1420
        %1422 = vdwg.mxu0
        %1423 = vst [vmem:[%s272] sm:$0xff] %v1385
        %1424 = vst [vmem:[%s272 + $0x8] sm:$0xff] %v1387
        %1425 = vst [vmem:[%s272 + $0x10] sm:$0xff] %v1389
        %1426 = vst [vmem:[%s272 + $0x18] sm:$0xff] %v1391
        %1427 = vst [vmem:[%s272 + $0x20] sm:$0xff] %v1395
        %1428 = vst [vmem:[%s272 + $0x28] sm:$0xff] %v1397
        %1429 = vst [vmem:[%s272 + $0x30] sm:$0xff] %v1399
        %1430 = vst [vmem:[%s272 + $0x38] sm:$0xff] %v1401
        %1431 = vst [vmem:[%s272 + $0x40] sm:$0xff] %v1405
        %1432 = vst [vmem:[%s272 + $0x48] sm:$0xff] %v1407
        %1433 = vst [vmem:[%s272 + $0x50] sm:$0xff] %v1409
        %1434 = vst [vmem:[%s272 + $0x58] sm:$0xff] %v1411
        %1435 = vst [vmem:[%s272 + $0x60] sm:$0xff] %v1415
        %1436 = vst [vmem:[%s272 + $0x68] sm:$0xff] %v1417
        %1437 = vst [vmem:[%s272 + $0x70] sm:$0xff] %v1419
        %1438 = vst [vmem:[%s272 + $0x78] sm:$0xff] %v1421
        %s1439 = sand.u32 %s181, 1
        %s1440 = scalar_lea.sflag [#allocation3], %s1439
        %s1441 = sand.u32 %s181, 1
        %s1442 = smul.addr %s1441, 128
        %s1443 = scalar_lea.vmem [#allocation2], %s1442
        // Predicated region
        $region49: #{point_cloud_projector.1} parent=47 // pred_check
          %p1444 = pneg %p191
        $region50: #{point_cloud_projector.1} parent=47 // pred_check_branch
          %1446 = sbr.rel (%p1444) target = $region52
        $region51: #{point_cloud_projector.1} parent=47 // pred_region
          %s1447 = smul.u32 8, %s21
          %s1449 = ssub.s32 2048, 2048
          %1450 = vsyncadd %s1440, %s1449
          %s1451 = smul.addr %s1447, 2
          %s1452 = smul.addr %s1451, 128
          %s1453 = scalar_lea.hbm %s7, %s1452
          %s1454 = sshll.u32 %s1443, 4
          %s1455 = int_to_ptr.vmem [resolvable:$true] %s1454
          %1460 = dma.vmem_to_hbm [thread:$0]  %s1455, 2048, %s1453, %s1440, 256, 256, 16
        $region52: #{point_cloud_projector.1} parent=47 // pred_fallthru
          _
      $region48: #{point_cloud_projector.1} parent=5 // pred_fallthru
        _
      %p1461 = scmp.le.s32.totalorder 2, %s16
      // Predicated region
      $region53: #{point_cloud_projector.1} parent=5 // pred_check
        %p1462 = pneg %p1461
      $region54: #{point_cloud_projector.1} parent=5 // pred_check_branch
        %1464 = sbr.rel (%p1462) target = $region56
      $region55: #{point_cloud_projector.1} parent=5 // pred_region
        %s1465 = ssub.s32 %s16, 2
        // Predicated region
        $region57: #{point_cloud_projector.1} parent=55 // pred_check
          %p1466 = pneg %p197
        $region58: #{point_cloud_projector.1} parent=55 // pred_check_branch
          %1468 = sbr.rel (%p1466) target = $region60
        $region59: #{point_cloud_projector.1} parent=55 // pred_region
          %s1469 = sand.u32 %s182, 1
          %s1470 = scalar_lea.sflag [#allocation3], %s1469
          %s1471 = sand.u32 %s182, 1
          %s1472 = smul.addr %s1471, 128
          %s1473 = scalar_lea.vmem [#allocation2], %s1472
          %1474 = dma.done %s1470, 2048
        $region60: #{point_cloud_projector.1} parent=55 // pred_fallthru
          _
      $region56: #{point_cloud_projector.1} parent=5 // pred_fallthru
        _
    $region6: #{point_cloud_projector.1} parent=1 // loop_footer
      %s20 = sadd.s32 1, %s16
    $region7: #{point_cloud_projector.1} parent=1 // loop_footer_branch
      %15 = sbr.rel target = $region3
    $region8: #{point_cloud_projector.1} parent=1 // loop_exit
      _
    %1475 = vsyncpa [#allocation3], 1
    %s1476 = scalar_lea.sflag [#allocation3], 1
    %1477 = vsyncpa %s1476, 1

</llo_original>
